<compile_context>
chip_gen: v7x
topology: tpu7x:2x2x1
jax: 0.10.0
libtpu: 0.0.40
codegen_flags: <defaults>
</compile_context>

<pallas_src>
import jax
import jax.numpy as jnp
from jax.experimental import pallas as pl
from jax.experimental.pallas import tpu as pltpu


def _round_up(x, m):
    return -(-x // m) * m


def cnn_kernel(x_ref, w_ref, b_ref, o_ref):
    """Conv1d(valid) + bias + ReLU + global max-pool for one batch tile.

    x_ref: (TILE_B, C*L)     f32, native PyTorch NCL layout flattened per row
    w_ref: (C*L, L_out*F)    bf16 banded conv weight (grid-resident)
    b_ref: (1, F)            f32 bias
    o_ref: (TILE_B, F)       f32 pooled output
    """
    f_out = o_ref.shape[1]
    n_cols = w_ref.shape[1]
    l_out = n_cols // f_out

    # In-kernel bf16 cast (VPU, hidden under the MXU); a single full-depth MXU
    # matmul implements the entire K-tap conv for this tile.
    x_bf = x_ref[...].astype(w_ref.dtype)
    acc = jnp.dot(x_bf, w_ref[...], preferred_element_type=jnp.float32)

    if n_cols % 128 == 0 and 128 % f_out == 0:
        # Stage 1: vreg-aligned 128-lane slabs, dense VPU maxima.  Columns are
        # (l, f)-ordered so slab s holds l positions [s*g, (s+1)*g), g = 128/F.
        pooled = acc[:, 0:128]
        for s in range(1, n_cols // 128):
            pooled = jnp.maximum(pooled, acc[:, s * 128:(s + 1) * 128])
        # Stage 2: intra-vreg halving reduce over the g groups via XLU rolls
        # (circular over the 128-lane axis; max is assoc/comm so lanes 0:F end
        # up holding the max over every group).
        shift = 64
        while shift >= f_out:
            pooled = jnp.maximum(pooled, pltpu.roll(pooled, shift, axis=1))
            shift //= 2
        pooled = pooled[:, 0:f_out]
    else:
        # Fallback for shapes that don't tile into 128-lane slabs.
        pooled = acc[:, 0:f_out]
        for l in range(1, l_out):
            pooled = jnp.maximum(pooled, acc[:, l * f_out:(l + 1) * f_out])

    # bias + ReLU commute with the max (relu monotone, bias const over l),
    # so only the pooled (TILE_B, F) slab is biased/activated.
    o_ref[...] = jnp.maximum(pooled + b_ref[...], 0.0).astype(o_ref.dtype)


def _banded_conv_weight(weight, seq_len):
    """weight (F, C, K) -> Wb (C*L, L_out*F) with
    Wb[c*L + j, l*F + f] = weight[f, c, j - l] if 0 <= j - l < K else 0."""
    f_out, c_in, k = weight.shape
    l_out = seq_len - k + 1
    j = jnp.arange(seq_len)
    l = jnp.arange(l_out)
    tap = j[None, :] - l[:, None]                       # (L_out, L)
    valid = (tap >= 0) & (tap < k)
    tap = jnp.clip(tap, 0, k - 1)
    w_ckf = jnp.transpose(weight, (1, 2, 0))            # (C, K, F)
    wb = w_ckf[:, tap, :]                               # (C, L_out, L, F)
    wb = jnp.where(valid[None, :, :, None], wb, 0.0)
    wb = jnp.transpose(wb, (0, 2, 1, 3))                # (C, L, L_out, F)
    return wb.reshape(c_in * seq_len, l_out * f_out)


def cnn_forward(x_ncl, weight, bias, *, tile_b=2048, compute_dtype=jnp.bfloat16):
    """x_ncl: (B, C, L) like PyTorch; weight: (F, C, K); bias: (F,) -> (B, F)."""
    b, c, l = x_ncl.shape
    f_out, c_w, k = weight.shape
    assert c == c_w
    l_out = l - k + 1
    n_cols = l_out * f_out

    # Native-layout flatten (free contiguous view); x stays f32 in HBM, the
    # bf16 cast happens inside the kernel (saves an extra HBM pass).
    x2d = x_ncl.reshape(b, c * l)
    wb = _banded_conv_weight(weight.astype(jnp.float32), l).astype(compute_dtype)
    b_1f = bias.reshape(1, f_out).astype(jnp.float32)

    # Tile selection:
    #  * rows per tile are a multiple of 8 (sublane rule); the ragged last
    #    tile (if any) is handled by Pallas partial-block masking - no jnp.pad,
    #  * the tile shrinks so the grid divides ~evenly (no near-full padded tile),
    #  * force >=2 tiles once B >= 1024 so the v7x megacore can shard the
    #    "parallel" axis across both TensorCores (one extra ~0.35us grid step
    #    on single-core generations, negligible at that size).
    b_pad8 = _round_up(b, 8)
    tile_cap = max(8, min(tile_b, b_pad8))
    n_tiles = -(-b_pad8 // tile_cap)
    if n_tiles == 1 and b_pad8 >= 1024:
        n_tiles = 2
    tile_rows = _round_up(-(-b_pad8 // n_tiles), 8)
    grid = (-(-b // tile_rows),)

    cost = pl.CostEstimate(
        flops=2 * b * (c * l) * n_cols,
        transcendentals=0,
        bytes_accessed=(b * c * l * 4            # x (f32)
                        + wb.size * 2            # banded weight (bf16)
                        + f_out * 4              # bias
                        + b * f_out * 4),        # pooled output (f32)
    )

    out = pl.pallas_call(
        cnn_kernel,
        out_shape=jax.ShapeDtypeStruct((b, f_out), jnp.float32),
        grid_spec=pltpu.PrefetchScalarGridSpec(
            num_scalar_prefetch=0,
            grid=grid,
            in_specs=[
                pl.BlockSpec((tile_rows, c * l), lambda i: (i, 0)),
                pl.BlockSpec((c * l, n_cols), lambda i: (0, 0)),
                pl.BlockSpec((1, f_out), lambda i: (0, 0)),
            ],
            out_specs=pl.BlockSpec((tile_rows, f_out), lambda i: (i, 0)),
        ),
        compiler_params=pltpu.CompilerParams(
            dimension_semantics=("parallel",),
        ),
        cost_estimate=cost,
    )(x2d, wb, b_1f)

    return out


def cnn_reference(x_ncl, weight, bias):
    """Pure-JAX f32 reference of the PyTorch forward (for validation)."""
    b, c, l = x_ncl.shape
    f_out, _, k = weight.shape
    l_out = l - k + 1
    x32 = x_ncl.astype(jnp.float32)
    w32 = weight.astype(jnp.float32)
    conv = jnp.zeros((b, f_out, l_out), jnp.float32)
    for kk in range(k):
        conv += jnp.einsum("bcl,fc->bfl", x32[:, :, kk:kk + l_out], w32[:, :, kk])
    conv = conv + bias[None, :, None].astype(jnp.float32)
    return jnp.max(jnp.maximum(conv, 0.0), axis=-1)


if __name__ == "__main__":
    # Small shapes consistent with the module.
    batch = 8
    embed_size_char = 16
    num_filters = 32
    max_word_length = 16
    kernel_size = 5

    key = jax.random.PRNGKey(0)
    kx, kw, kb = jax.random.split(key, 3)

    # Deterministic synthetic parameters (Conv1d: weight (F, C, K), bias (F,)).
    x = jax.random.normal(kx, (batch, embed_size_char, max_word_length), jnp.float32)
    weight = jax.random.normal(kw, (num_filters, embed_size_char, kernel_size),
                               jnp.float32) * 0.1
    bias = jax.random.normal(kb, (num_filters,), jnp.float32) * 0.1

    out = cnn_forward(x, weight, bias)
    out = jax.block_until_ready(out)
    assert out.shape == (batch, num_filters), out.shape

    # Tight check against a reference using the same bf16 rounding of x / w
    # (validates the kernel math, banded weight and the roll-based pooling).
    x_bf = x.astype(jnp.bfloat16).astype(jnp.float32)
    w_bf = weight.astype(jnp.bfloat16).astype(jnp.float32)
    ref_matched = cnn_reference(x_bf, w_bf, bias)
    assert jnp.allclose(out, ref_matched, atol=1e-4, rtol=1e-4), "kernel math mismatch"

    # Looser check against the full-f32 PyTorch-equivalent reference
    # (difference is only the bf16 quantisation on the MXU path).
    ref_f32 = cnn_reference(x, weight, bias)
    assert jnp.allclose(out, ref_f32, atol=3e-2, rtol=3e-2), "mismatch vs f32 reference"

    print("KERNEL_OK")
</pallas_src>

<mosaic_0001>
module attributes {stable_mosaic.version = 11 : i64} {
  func.func @cnn_kernel(%arg0: i32, %arg1: memref<8x256xf32, #tpu.memory_space<vmem>>, %arg2: memref<256x384xbf16, #tpu.memory_space<vmem>>, %arg3: memref<1x32xf32, #tpu.memory_space<vmem>>, %arg4: memref<8x32xf32, #tpu.memory_space<vmem>>) attributes {dimension_semantics = [#tpu.dimension_semantics<parallel>], iteration_bounds = array<i64: 1>, scalar_prefetch = 0 : i64, scratch_operands = 0 : i64, tpu.core_type = #tpu.core_type<tc>, window_params = [{transform_indices = @transform_0, window_bounds = array<i64: 8, 256>}, {pipeline_mode = #tpu.pipeline_mode<synchronous>, transform_indices = @transform_1, window_bounds = array<i64: 256, 384>}, {pipeline_mode = #tpu.pipeline_mode<synchronous>, transform_indices = @transform_2, window_bounds = array<i64: 1, 32>}, {transform_indices = @transform_3, window_bounds = array<i64: 8, 32>}]} {
    %c0 = arith.constant 0 : index
    %c0_0 = arith.constant 0 : index
    %0 = vector.load %arg1[%c0, %c0_0] : memref<8x256xf32, #tpu.memory_space<vmem>>, vector<8x256xf32>
    %1 = arith.truncf %0 : vector<8x256xf32> to vector<8x256xbf16>
    %c0_1 = arith.constant 0 : index
    %c0_2 = arith.constant 0 : index
    %2 = vector.load %arg2[%c0_1, %c0_2] : memref<256x384xbf16, #tpu.memory_space<vmem>>, vector<256x384xbf16>
    %cst = arith.constant dense<0.000000e+00> : vector<8x384xf32>
    %3 = tpu.matmul %1, %2, %cst {dimension_numbers = #tpu.dot_dimension_numbers<[1], [0], [0], [1], [0, 0, 1, 1], [], []>} : vector<8x256xbf16>, vector<256x384xbf16>, vector<8x384xf32> -> vector<8x384xf32>
    %4 = vector.extract_strided_slice %3 {offsets = [0, 0], sizes = [8, 128], strides = [1, 1]} : vector<8x384xf32> to vector<8x128xf32>
    %5 = vector.extract_strided_slice %3 {offsets = [0, 128], sizes = [8, 128], strides = [1, 1]} : vector<8x384xf32> to vector<8x128xf32>
    %6 = arith.maximumf %4, %5 : vector<8x128xf32>
    %7 = vector.extract_strided_slice %3 {offsets = [0, 256], sizes = [8, 128], strides = [1, 1]} : vector<8x384xf32> to vector<8x128xf32>
    %8 = arith.maximumf %6, %7 : vector<8x128xf32>
    %c64_i32 = arith.constant 64 : i32
    %9 = tpu.dynamic_rotate %8 by %c64_i32 dim 1 : vector<8x128xf32>, i32 -> vector<8x128xf32>
    %10 = arith.maximumf %8, %9 : vector<8x128xf32>
    %c32_i32 = arith.constant 32 : i32
    %11 = tpu.dynamic_rotate %10 by %c32_i32 dim 1 : vector<8x128xf32>, i32 -> vector<8x128xf32>
    %12 = arith.maximumf %10, %11 : vector<8x128xf32>
    %13 = vector.extract_strided_slice %12 {offsets = [0, 0], sizes = [8, 32], strides = [1, 1]} : vector<8x128xf32> to vector<8x32xf32>
    %c0_3 = arith.constant 0 : index
    %c0_4 = arith.constant 0 : index
    %14 = vector.load %arg3[%c0_3, %c0_4] : memref<1x32xf32, #tpu.memory_space<vmem>>, vector<1x32xf32>
    %15 = vector.broadcast %14 : vector<1x32xf32> to vector<8x32xf32>
    %16 = arith.addf %13, %15 : vector<8x32xf32>
    %cst_5 = arith.constant 0.000000e+00 : f32
    %17 = vector.broadcast %cst_5 : f32 to vector<8x32xf32>
    %18 = arith.maximumf %16, %17 : vector<8x32xf32>
    %c0_6 = arith.constant 0 : index
    %c0_7 = arith.constant 0 : index
    %19 = vector.load %arg4[%c0_6, %c0_7] : memref<8x32xf32, #tpu.memory_space<vmem>>, vector<8x32xf32>
    tpu.vector_store %arg4[%c0_6, %c0_7], %18 {strides = array<i32>} : memref<8x32xf32, #tpu.memory_space<vmem>>, vector<8x32xf32>,
    return
  }
  func.func @transform_0(%arg0: i32) -> (i32, i32) {
    %c0_i32 = arith.constant 0 : i32
    %c0_i32_0 = arith.constant 0 : i32
    return %arg0, %c0_i32 : i32, i32
  }
  func.func @transform_1(%arg0: i32) -> (i32, i32) {
    %c0_i32 = arith.constant 0 : i32
    %c0_i32_0 = arith.constant 0 : i32
    %c0_i32_1 = arith.constant 0 : i32
    return %c0_i32, %c0_i32_0 : i32, i32
  }
  func.func @transform_2(%arg0: i32) -> (i32, i32) {
    %c0_i32 = arith.constant 0 : i32
    %c0_i32_0 = arith.constant 0 : i32
    %c0_i32_1 = arith.constant 0 : i32
    return %c0_i32, %c0_i32_0 : i32, i32
  }
  func.func @transform_3(%arg0: i32) -> (i32, i32) {
    %c0_i32 = arith.constant 0 : i32
    %c0_i32_0 = arith.constant 0 : i32
    return %arg0, %c0_i32 : i32, i32
  }
}

</mosaic_0001>

<llo_original>
// kernel: tpu_custom_call.1
$region0: #{tpu_custom_call.1}
  #allocation0 [shape = 'u32[]', space=smem, size = 0x4, offset = 0x4, fixed_abs, tag = 'smem constant byte address 0x4 - core index']
  #allocation1 [shape = 'u32[144,128]{1,0:T(1,128)}', space=vmem, size = 0x12000, scoped, tag = 'internal scratch']
  %s0 = inlined_call_operand.hbm [shape: f32[8,256], index: 0, kind: input, shape index: {}]
  %s1 = inlined_call_operand.hbm [shape: bf16[256,384], index: 1, kind: input, shape index: {}]
  %s2 = inlined_call_operand.vmem [shape: f32[1,32], index: 2, kind: input, shape index: {}]
  %s3 = inlined_call_operand.hbm [shape: f32[8,32], index: 3, kind: output, shape index: {}]
  %s4 = sld [smem:[#allocation0]]
  $region30: #{tpu_custom_call.1} parent=0
    _
  %s6 = ssub.s32 1, %s4
  %s7 = scalar_select 0, %s6, %s4
  $region1: #{tpu_custom_call.1} parent=0
    #allocation2 [shape = 'u8[8192]{0}', space=vmem, size = 0x2000, scoped, tag = 'input window, operand 0, single buffered']
    #allocation3 [shape = 's32[1]{0}', space=sflag, size = 0x4, scoped, tag = 'scoped memory for tpu_custom_call.1']
    #allocation4 [shape = 's32[1]{0}', space=sflag, size = 0x4, scoped, tag = 'scoped memory for tpu_custom_call.1']
    #allocation5 [shape = 'u8[196608]{0}', space=vmem, size = 0x30000, scoped, tag = 'input window, operand 1, single buffered']
    #allocation6 [shape = 's32[1]{0}', space=sflag, size = 0x4, scoped, tag = 'scoped memory for tpu_custom_call.1']
    #allocation7 [shape = 'u8[4096]{0}', space=vmem, size = 0x1000, scoped, tag = 'output window, operand 0, single buffered']
    %8 = vsyncpa [#allocation3], 0
    %9 = vsyncpa [#allocation6], 0
    %10 = vsyncpa [#allocation4], 0
    // Predicated region
    $region2: #{tpu_custom_call.1} parent=1 // pred_check
      _
    $region3: #{tpu_custom_call.1} parent=1 // pred_check_branch
      %12 = sbr.rel (0) target = $region5
    $region4: #{tpu_custom_call.1} parent=1 // pred_region
      %s14 = ssub.s32 256, 256
      %15 = vsyncadd [#allocation3], %s14
      %s17 = sshll.u32 [#allocation2], 4
      %s18 = int_to_ptr.vmem [resolvable:$true] %s17
      %20 = dma.hbm_to_vmem [thread:$0]  %s0, 256, %s18, [#allocation3]
    $region5: #{tpu_custom_call.1} parent=1 // pred_fallthru
      _
    // Predicated region
    $region6: #{tpu_custom_call.1} parent=1 // pred_check
      _
    $region7: #{tpu_custom_call.1} parent=1 // pred_check_branch
      %22 = sbr.rel (0) target = $region9
    $region8: #{tpu_custom_call.1} parent=1 // pred_region
      %s24 = ssub.s32 6144, 6144
      %25 = vsyncadd [#allocation6], %s24
      %s26 = sshll.u32 [#allocation5], 4
      %s27 = int_to_ptr.vmem [resolvable:$true] %s26
      %32 = dma.hbm_to_vmem [thread:$0]  %s1, 6144, %s27, [#allocation6], 192, 192, 12
    $region9: #{tpu_custom_call.1} parent=1 // pred_fallthru
      _
    // Predicated region
    $region10: #{tpu_custom_call.1} parent=1 // pred_check
      _
    $region11: #{tpu_custom_call.1} parent=1 // pred_check_branch
      %34 = sbr.rel (0) target = $region13
    $region12: #{tpu_custom_call.1} parent=1 // pred_region
      _
    $region13: #{tpu_custom_call.1} parent=1 // pred_fallthru
      _
    // Predicated region
    $region14: #{tpu_custom_call.1} parent=1 // pred_check
      _
    $region15: #{tpu_custom_call.1} parent=1 // pred_check_branch
      %36 = sbr.rel (0) target = $region17
    $region16: #{tpu_custom_call.1} parent=1 // pred_region
      %37 = dma.done [#allocation3], 256
    $region17: #{tpu_custom_call.1} parent=1 // pred_fallthru
      _
    // Predicated region
    $region18: #{tpu_custom_call.1} parent=1 // pred_check
      _
    $region19: #{tpu_custom_call.1} parent=1 // pred_check_branch
      %39 = sbr.rel (0) target = $region21
    $region20: #{tpu_custom_call.1} parent=1 // pred_region
      %40 = dma.done [#allocation6], 6144
    $region21: #{tpu_custom_call.1} parent=1 // pred_fallthru
      _
    %v42 = vld [vmem:[#allocation2] sm:$0xff]
    %v43 = vld [vmem:[#allocation2 + $0x8] sm:$0xff]
    %v44 = vpack.c.bf16 %v42, %v42
    %v45 = vpack.c.bf16 %v43, %v43
    %v46 = vld [vmem:[#allocation5] sm:$0xff]
    %v47 = vld [vmem:[#allocation5 + $0x8] sm:$0xf]
    %v48 = vld [vmem:[#allocation5 + $0xc] sm:$0xff]
    %v49 = vld [vmem:[#allocation5 + $0x14] sm:$0xf]
    %v50 = vld [vmem:[#allocation5 + $0x18] sm:$0xff]
    %v51 = vld [vmem:[#allocation5 + $0x20] sm:$0xf]
    %v52 = vld [vmem:[#allocation5 + $0x24] sm:$0xff]
    %v53 = vld [vmem:[#allocation5 + $0x2c] sm:$0xf]
    %v54 = vld [vmem:[#allocation5 + $0x30] sm:$0xff]
    %v55 = vld [vmem:[#allocation5 + $0x38] sm:$0xf]
    %v56 = vld [vmem:[#allocation5 + $0x3c] sm:$0xff]
    %v57 = vld [vmem:[#allocation5 + $0x44] sm:$0xf]
    %v58 = vld [vmem:[#allocation5 + $0x48] sm:$0xff]
    %v59 = vld [vmem:[#allocation5 + $0x50] sm:$0xf]
    %v60 = vld [vmem:[#allocation5 + $0x54] sm:$0xff]
    %v61 = vld [vmem:[#allocation5 + $0x5c] sm:$0xf]
    %v62 = vld [vmem:[#allocation5 + $0x60] sm:$0xff]
    %v63 = vld [vmem:[#allocation5 + $0x68] sm:$0xf]
    %v64 = vld [vmem:[#allocation5 + $0x6c] sm:$0xff]
    %v65 = vld [vmem:[#allocation5 + $0x74] sm:$0xf]
    %v66 = vld [vmem:[#allocation5 + $0x78] sm:$0xff]
    %v67 = vld [vmem:[#allocation5 + $0x80] sm:$0xf]
    %v68 = vld [vmem:[#allocation5 + $0x84] sm:$0xff]
    %v69 = vld [vmem:[#allocation5 + $0x8c] sm:$0xf]
    %v70 = vld [vmem:[#allocation5 + $0x90] sm:$0xff]
    %v71 = vld [vmem:[#allocation5 + $0x98] sm:$0xf]
    %v72 = vld [vmem:[#allocation5 + $0x9c] sm:$0xff]
    %v73 = vld [vmem:[#allocation5 + $0xa4] sm:$0xf]
    %v74 = vld [vmem:[#allocation5 + $0xa8] sm:$0xff]
    %v75 = vld [vmem:[#allocation5 + $0xb0] sm:$0xf]
    %v76 = vld [vmem:[#allocation5 + $0xb4] sm:$0xff]
    %v77 = vld [vmem:[#allocation5 + $0xbc] sm:$0xf]
    %v78 = vld [vmem:[#allocation5 + $0xc0] sm:$0xff]
    %v79 = vld [vmem:[#allocation5 + $0xc8] sm:$0xf]
    %v80 = vld [vmem:[#allocation5 + $0xcc] sm:$0xff]
    %v81 = vld [vmem:[#allocation5 + $0xd4] sm:$0xf]
    %v82 = vld [vmem:[#allocation5 + $0xd8] sm:$0xff]
    %v83 = vld [vmem:[#allocation5 + $0xe0] sm:$0xf]
    %v84 = vld [vmem:[#allocation5 + $0xe4] sm:$0xff]
    %v85 = vld [vmem:[#allocation5 + $0xec] sm:$0xf]
    %v86 = vld [vmem:[#allocation5 + $0xf0] sm:$0xff]
    %v87 = vld [vmem:[#allocation5 + $0xf8] sm:$0xf]
    %v88 = vld [vmem:[#allocation5 + $0xfc] sm:$0xff]
    %v89 = vld [vmem:[#allocation5 + $0x104] sm:$0xf]
    %v90 = vld [vmem:[#allocation5 + $0x108] sm:$0xff]
    %v91 = vld [vmem:[#allocation5 + $0x110] sm:$0xf]
    %v92 = vld [vmem:[#allocation5 + $0x114] sm:$0xff]
    %v93 = vld [vmem:[#allocation5 + $0x11c] sm:$0xf]
    %v94 = vld [vmem:[#allocation5 + $0x120] sm:$0xff]
    %v95 = vld [vmem:[#allocation5 + $0x128] sm:$0xf]
    %v96 = vld [vmem:[#allocation5 + $0x12c] sm:$0xff]
    %v97 = vld [vmem:[#allocation5 + $0x134] sm:$0xf]
    %v98 = vld [vmem:[#allocation5 + $0x138] sm:$0xff]
    %v99 = vld [vmem:[#allocation5 + $0x140] sm:$0xf]
    %v100 = vld [vmem:[#allocation5 + $0x144] sm:$0xff]
    %v101 = vld [vmem:[#allocation5 + $0x14c] sm:$0xf]
    %v102 = vld [vmem:[#allocation5 + $0x150] sm:$0xff]
    %v103 = vld [vmem:[#allocation5 + $0x158] sm:$0xf]
    %v104 = vld [vmem:[#allocation5 + $0x15c] sm:$0xff]
    %v105 = vld [vmem:[#allocation5 + $0x164] sm:$0xf]
    %v106 = vld [vmem:[#allocation5 + $0x168] sm:$0xff]
    %v107 = vld [vmem:[#allocation5 + $0x170] sm:$0xf]
    %v108 = vld [vmem:[#allocation5 + $0x174] sm:$0xff]
    %v109 = vld [vmem:[#allocation5 + $0x17c] sm:$0xf]
    %v174 = vunpack.c.l.b16 %v46
    %v175 = vunpack.c.h.b16 %v46
    %v176 = vunpack.c.l.b16 %v47
    %v177 = vunpack.c.l.b16 %v48
    %v178 = vunpack.c.h.b16 %v48
    %v179 = vunpack.c.l.b16 %v49
    %v180 = vunpack.c.l.b16 %v50
    %v181 = vunpack.c.h.b16 %v50
    %v182 = vunpack.c.l.b16 %v51
    %v183 = vunpack.c.l.b16 %v52
    %v184 = vunpack.c.h.b16 %v52
    %v185 = vunpack.c.l.b16 %v53
    %v186 = vunpack.c.l.b16 %v54
    %v187 = vunpack.c.h.b16 %v54
    %v188 = vunpack.c.l.b16 %v55
    %v189 = vunpack.c.l.b16 %v56
    %v190 = vunpack.c.h.b16 %v56
    %v191 = vunpack.c.l.b16 %v57
    %v192 = vunpack.c.l.b16 %v58
    %v193 = vunpack.c.h.b16 %v58
    %v194 = vunpack.c.l.b16 %v59
    %v195 = vunpack.c.l.b16 %v60
    %v196 = vunpack.c.h.b16 %v60
    %v197 = vunpack.c.l.b16 %v61
    %v198 = vunpack.c.l.b16 %v62
    %v199 = vunpack.c.h.b16 %v62
    %v200 = vunpack.c.l.b16 %v63
    %v201 = vunpack.c.l.b16 %v64
    %v202 = vunpack.c.h.b16 %v64
    %v203 = vunpack.c.l.b16 %v65
    %v204 = vunpack.c.l.b16 %v66
    %v205 = vunpack.c.h.b16 %v66
    %v206 = vunpack.c.l.b16 %v67
    %v207 = vunpack.c.l.b16 %v68
    %v208 = vunpack.c.h.b16 %v68
    %v209 = vunpack.c.l.b16 %v69
    %v210 = vunpack.c.l.b16 %v70
    %v211 = vunpack.c.h.b16 %v70
    %v212 = vunpack.c.l.b16 %v71
    %v213 = vunpack.c.l.b16 %v72
    %v214 = vunpack.c.h.b16 %v72
    %v215 = vunpack.c.l.b16 %v73
    %v216 = vunpack.c.l.b16 %v74
    %v217 = vunpack.c.h.b16 %v74
    %v218 = vunpack.c.l.b16 %v75
    %v219 = vunpack.c.l.b16 %v76
    %v220 = vunpack.c.h.b16 %v76
    %v221 = vunpack.c.l.b16 %v77
    %v222 = vunpack.c.l.b16 %v78
    %v223 = vunpack.c.h.b16 %v78
    %v224 = vunpack.c.l.b16 %v79
    %v225 = vunpack.c.l.b16 %v80
    %v226 = vunpack.c.h.b16 %v80
    %v227 = vunpack.c.l.b16 %v81
    %v228 = vunpack.c.l.b16 %v82
    %v229 = vunpack.c.h.b16 %v82
    %v230 = vunpack.c.l.b16 %v83
    %v231 = vunpack.c.l.b16 %v84
    %v232 = vunpack.c.h.b16 %v84
    %v233 = vunpack.c.l.b16 %v85
    %v234 = vunpack.c.l.b16 %v86
    %v235 = vunpack.c.h.b16 %v86
    %v236 = vunpack.c.l.b16 %v87
    %v237 = vunpack.c.l.b16 %v88
    %v238 = vunpack.c.h.b16 %v88
    %v239 = vunpack.c.l.b16 %v89
    %v240 = vunpack.c.l.b16 %v90
    %v241 = vunpack.c.h.b16 %v90
    %v242 = vunpack.c.l.b16 %v91
    %v243 = vunpack.c.l.b16 %v92
    %v244 = vunpack.c.h.b16 %v92
    %v245 = vunpack.c.l.b16 %v93
    %v246 = vunpack.c.l.b16 %v94
    %v247 = vunpack.c.h.b16 %v94
    %v248 = vunpack.c.l.b16 %v95
    %v249 = vunpack.c.l.b16 %v96
    %v250 = vunpack.c.h.b16 %v96
    %v251 = vunpack.c.l.b16 %v97
    %v252 = vunpack.c.l.b16 %v98
    %v253 = vunpack.c.h.b16 %v98
    %v254 = vunpack.c.l.b16 %v99
    %v255 = vunpack.c.l.b16 %v100
    %v256 = vunpack.c.h.b16 %v100
    %v257 = vunpack.c.l.b16 %v101
    %v258 = vunpack.c.l.b16 %v102
    %v259 = vunpack.c.h.b16 %v102
    %v260 = vunpack.c.l.b16 %v103
    %v261 = vunpack.c.l.b16 %v104
    %v262 = vunpack.c.h.b16 %v104
    %v263 = vunpack.c.l.b16 %v105
    %v264 = vunpack.c.l.b16 %v106
    %v265 = vunpack.c.h.b16 %v106
    %v266 = vunpack.c.l.b16 %v107
    %v267 = vunpack.c.l.b16 %v108
    %v268 = vunpack.c.h.b16 %v108
    %v269 = vunpack.c.l.b16 %v109
    %v270 = vpack.c.b16 %v177, %v174
    %v271 = vpack.c.b16 %v178, %v175
    %v272 = vpack.c.b16 %v179, %v176
    %v273 = vpack.c.b16 %v183, %v180
    %v274 = vpack.c.b16 %v184, %v181
    %v275 = vpack.c.b16 %v185, %v182
    %v276 = vpack.c.b16 %v189, %v186
    %v277 = vpack.c.b16 %v190, %v187
    %v278 = vpack.c.b16 %v191, %v188
    %v279 = vpack.c.b16 %v195, %v192
    %v280 = vpack.c.b16 %v196, %v193
    %v281 = vpack.c.b16 %v197, %v194
    %v282 = vpack.c.b16 %v201, %v198
    %v283 = vpack.c.b16 %v202, %v199
    %v284 = vpack.c.b16 %v203, %v200
    %v285 = vpack.c.b16 %v207, %v204
    %v286 = vpack.c.b16 %v208, %v205
    %v287 = vpack.c.b16 %v209, %v206
    %v288 = vpack.c.b16 %v213, %v210
    %v289 = vpack.c.b16 %v214, %v211
    %v290 = vpack.c.b16 %v215, %v212
    %v291 = vpack.c.b16 %v219, %v216
    %v292 = vpack.c.b16 %v220, %v217
    %v293 = vpack.c.b16 %v221, %v218
    %v294 = vpack.c.b16 %v225, %v222
    %v295 = vpack.c.b16 %v226, %v223
    %v296 = vpack.c.b16 %v227, %v224
    %v297 = vpack.c.b16 %v231, %v228
    %v298 = vpack.c.b16 %v232, %v229
    %v299 = vpack.c.b16 %v233, %v230
    %v300 = vpack.c.b16 %v237, %v234
    %v301 = vpack.c.b16 %v238, %v235
    %v302 = vpack.c.b16 %v239, %v236
    %v303 = vpack.c.b16 %v243, %v240
    %v304 = vpack.c.b16 %v244, %v241
    %v305 = vpack.c.b16 %v245, %v242
    %v306 = vpack.c.b16 %v249, %v246
    %v307 = vpack.c.b16 %v250, %v247
    %v308 = vpack.c.b16 %v251, %v248
    %v309 = vpack.c.b16 %v255, %v252
    %v310 = vpack.c.b16 %v256, %v253
    %v311 = vpack.c.b16 %v257, %v254
    %v312 = vpack.c.b16 %v261, %v258
    %v313 = vpack.c.b16 %v262, %v259
    %v314 = vpack.c.b16 %v263, %v260
    %v315 = vpack.c.b16 %v267, %v264
    %v316 = vpack.c.b16 %v268, %v265
    %v317 = vpack.c.b16 %v269, %v266
    %366 = vmatprep.subr.bf16.mxu0 %v271
    %367 = vmatpush1.bf16.msra.mxu0 %v270
    %368 = vmatprep.subr.bf16.mxu0 %v274
    %369 = vmatpush1.bf16.msra.mxu0 %v273
    %370 = vmatprep.subr.bf16.mxu0 %v277
    %371 = vmatpush1.bf16.msra.mxu0 %v276
    %372 = vmatprep.subr.bf16.mxu0 %v280
    %373 = vmatpush1.bf16.msra.mxu0 %v279
    %374 = vmatprep.subr.bf16.mxu0 %v283
    %375 = vmatpush1.bf16.msra.mxu0 %v282
    %376 = vmatprep.subr.bf16.mxu0 %v286
    %377 = vmatpush1.bf16.msra.mxu0 %v285
    %378 = vmatprep.subr.bf16.mxu0 %v289
    %379 = vmatpush1.bf16.msra.mxu0 %v288
    %380 = vmatprep.subr.bf16.mxu0 %v292
    %381 = vmatpush1.bf16.msra.mxu0 %v291
    %382 = vmatprep.subr.bf16.mxu0 %v295
    %383 = vmatpush1.bf16.msra.mxu0 %v294
    %384 = vmatprep.subr.bf16.mxu0 %v298
    %385 = vmatpush1.bf16.msra.mxu0 %v297
    %386 = vmatprep.subr.bf16.mxu0 %v301
    %387 = vmatpush1.bf16.msra.mxu0 %v300
    %388 = vmatprep.subr.bf16.mxu0 %v304
    %389 = vmatpush1.bf16.msra.mxu0 %v303
    %390 = vmatprep.subr.bf16.mxu0 %v307
    %391 = vmatpush1.bf16.msra.mxu0 %v306
    %392 = vmatprep.subr.bf16.mxu0 %v310
    %393 = vmatpush1.bf16.msra.mxu0 %v309
    %394 = vmatprep.subr.bf16.mxu0 %v313
    %395 = vmatpush1.bf16.msra.mxu0 %v312
    %396 = vmatprep.subr.bf16.mxu0 %v316
    %397 = vmatpush1.bf16.msra.mxu0 %v315
    %398 = vmatprep.mubr.bf16.mxu0 %v45
    %399 = vmatmul.mubr.bf16.gmra.mrb[0].mxu0 %v44
    %v400 = vpop.f32.mrb[0].mxu0
    %v401 = vadd.f32 0.0, %v400
    %v402 = vpop.f32.mrb[0].mxu0
    %v403 = vadd.f32 0.0, %v402
    %v404 = vpop.f32.mrb[0].mxu0
    %v405 = vpop.f32.mrb[0].mxu0
    %406 = vdwg.mxu0
    %407 = vmatprep.subr.bf16.mxu0 0
    %408 = vmatpush1.bf16.msra.mxu0 %v272
    %409 = vmatprep.subr.bf16.mxu0 0
    %410 = vmatpush1.bf16.msra.mxu0 %v275
    %411 = vmatprep.subr.bf16.mxu0 0
    %412 = vmatpush1.bf16.msra.mxu0 %v278
    %413 = vmatprep.subr.bf16.mxu0 0
    %414 = vmatpush1.bf16.msra.mxu0 %v281
    %415 = vmatprep.subr.bf16.mxu0 0
    %416 = vmatpush1.bf16.msra.mxu0 %v284
    %417 = vmatprep.subr.bf16.mxu0 0
    %418 = vmatpush1.bf16.msra.mxu0 %v287
    %419 = vmatprep.subr.bf16.mxu0 0
    %420 = vmatpush1.bf16.msra.mxu0 %v290
    %421 = vmatprep.subr.bf16.mxu0 0
    %422 = vmatpush1.bf16.msra.mxu0 %v293
    %423 = vmatprep.subr.bf16.mxu0 0
    %424 = vmatpush1.bf16.msra.mxu0 %v296
    %425 = vmatprep.subr.bf16.mxu0 0
    %426 = vmatpush1.bf16.msra.mxu0 %v299
    %427 = vmatprep.subr.bf16.mxu0 0
    %428 = vmatpush1.bf16.msra.mxu0 %v302
    %429 = vmatprep.subr.bf16.mxu0 0
    %430 = vmatpush1.bf16.msra.mxu0 %v305
    %431 = vmatprep.subr.bf16.mxu0 0
    %432 = vmatpush1.bf16.msra.mxu0 %v308
    %433 = vmatprep.subr.bf16.mxu0 0
    %434 = vmatpush1.bf16.msra.mxu0 %v311
    %435 = vmatprep.subr.bf16.mxu0 0
    %436 = vmatpush1.bf16.msra.mxu0 %v314
    %437 = vmatprep.subr.bf16.mxu0 0
    %438 = vmatpush1.bf16.msra.mxu0 %v317
    %439 = vmatprep.mubr.bf16.mxu0 %v45
    %440 = vmatmul.mubr.bf16.gmra.mrb[0].mxu0 %v44
    %v441 = vpop.f32.mrb[0].mxu0
    %v442 = vadd.f32 0.0, %v441
    %v443 = vpop.f32.mrb[0].mxu0
    %v444 = vpop.f32.mrb[0].mxu0
    %v445 = vpop.f32.mrb[0].mxu0
    %446 = vdwg.mxu0
    %v447 = vmax.f32 %v401, %v403
    %v448 = vmax.f32 %v447, %v442
    %449 = vrot.lane.b32.xlu0 %v448, 64
    %v450 = vpop.permute.xlu0 %449
    %v451 = vmax.f32 %v448, %v450
    %452 = vrot.lane.b32.xlu0 %v451, 32
    %v453 = vpop.permute.xlu0 %452
    %v454 = vmax.f32 %v451, %v453
    %v455 = vld [vmem:[%s2] sm:$0x1]
    %v457 = vlaneseq
    %v458 = vshrl.u32 %v457, 7
    %v459 = vsub.s32 0, %v458
    %v460 = vrot.slane %v455, %v459
    %v462 = vadd.f32 %v454, %v460
    %v463 = vmax.f32 %v462, 0.0
    %vm464 = vcmask 261120
    %465 = vst.msk [vmem:[#allocation7] sm:$0xff] %vm464, %v463
    // Predicated region
    $region22: #{tpu_custom_call.1} parent=1 // pred_check
      _
    $region23: #{tpu_custom_call.1} parent=1 // pred_check_branch
      %467 = sbr.rel (0) target = $region25
    $region24: #{tpu_custom_call.1} parent=1 // pred_region
      %s469 = ssub.s32 128, 128
      %470 = vsyncadd [#allocation4], %s469
      %s472 = sshll.u32 [#allocation7], 4
      %s473 = int_to_ptr.vmem [resolvable:$true] %s472
      %475 = dma.vmem_to_hbm [thread:$0]  %s473, 128, %s3, [#allocation4]
    $region25: #{tpu_custom_call.1} parent=1 // pred_fallthru
      _
    // Predicated region
    $region26: #{tpu_custom_call.1} parent=1 // pred_check
      _
    $region27: #{tpu_custom_call.1} parent=1 // pred_check_branch
      %477 = sbr.rel (0) target = $region29
    $region28: #{tpu_custom_call.1} parent=1 // pred_region
      %478 = dma.done [#allocation4], 128
    $region29: #{tpu_custom_call.1} parent=1 // pred_fallthru
      _
    %479 = vsyncpa [#allocation3], 1
    %480 = vsyncpa [#allocation6], 1
    %481 = vsyncpa [#allocation4], 1

</llo_original>
